<compile_context>
chip_gen: v7x
topology: tpu7x:2x2x1
jax: 0.10.0
libtpu: 0.0.40
codegen_flags: <defaults>
</compile_context>

<pallas_src>
import jax
import jax.numpy as jnp
from jax.experimental import pallas as pl
from jax.experimental.pallas import tpu as pltpu


# ---------------------------------------------------------------------------
# Kernels: accumulate a partial gram  G_s = sum_k f_k f_k^T  over the K tiles
# owned by split `s`.  grid = (n_splits, n_inner); the inner axis is the
# reduction (output block resident across it), the leading axis is parallel.
# ---------------------------------------------------------------------------
def _gram_partial_kernel(f_ref, o_ref):
    k = pl.program_id(1)

    @pl.when(k == 0)
    def _():
        o_ref[...] = jnp.zeros_like(o_ref)

    f = f_ref[...]
    o_ref[...] += jax.lax.dot_general(
        f, f, (((1,), (1,)), ((), ())),
        preferred_element_type=jnp.float32)[None]


def _gram_partial_kernel_masked(f_ref, m_ref, o_ref):
    k = pl.program_id(1)

    @pl.when(k == 0)
    def _():
        o_ref[...] = jnp.zeros_like(o_ref)

    # elementwise masking fused with the gram accumulation (hot path);
    # the bf16->f32 cast is free VPU filler under the DMA/MXU.
    fm = f_ref[...] * m_ref[...].astype(jnp.float32)
    o_ref[...] += jax.lax.dot_general(
        fm, fm, (((1,), (1,)), ((), ())),
        preferred_element_type=jnp.float32)[None]


# ---------------------------------------------------------------------------
# Tiling selection + pallas_call wrapper
# ---------------------------------------------------------------------------
def _pick_tiling(M, K, mask_bytes, tk_cap, max_splits, vmem_budget):
    """Pad K to a multiple of 128 and pick the widest K tile that fits VMEM."""
    k_pad = ((K + 127) // 128) * 128
    per_col = 2 * M * (4 + mask_bytes)        # double-buffered feature(+mask) bytes / col
    out_bytes = 2 * M * M * 4                 # output block buffers
    tk = 128
    t = 128
    cap = max(128, int(tk_cap))
    while t <= min(k_pad, cap):
        if k_pad % t == 0 and t * per_col + out_bytes + (1 << 20) <= vmem_budget:
            tk = t
        t += 128
    n_tiles = k_pad // tk
    n_splits = max_splits if (max_splits > 1 and n_tiles % max_splits == 0) else 1
    n_inner = n_tiles // n_splits
    return k_pad, tk, n_splits, n_inner


def gram_matrix_pallas(features_flat, mask_flat=None, *,
                       tk_cap=2048, max_splits=2,
                       vmem_budget=32 * 1024 * 1024):
    """Returns G = (f*m) @ (f*m)^T for f = features_flat (M, K) f32 (no /denom)."""
    M, K = features_flat.shape
    mask_bytes = 0 if mask_flat is None else jnp.dtype(mask_flat.dtype).itemsize
    k_pad, tk, n_splits, n_inner = _pick_tiling(
        M, K, mask_bytes, tk_cap, max_splits, vmem_budget)

    if k_pad != K:
        # zero columns contribute 0 to f f^T -> mathematically neutral padding
        features_flat = jnp.pad(features_flat, ((0, 0), (0, k_pad - K)))
        if mask_flat is not None:
            mask_flat = jnp.pad(mask_flat, ((0, 0), (0, k_pad - K)))

    in_specs = [pl.BlockSpec((M, tk), lambda s, k: (0, s * n_inner + k))]
    args = [features_flat]
    kernel = _gram_partial_kernel
    if mask_flat is not None:
        in_specs.append(pl.BlockSpec((M, tk), lambda s, k: (0, s * n_inner + k)))
        args.append(mask_flat)
        kernel = _gram_partial_kernel_masked

    vmem_need = 2 * M * tk * (4 + mask_bytes) + 2 * M * M * 4
    vmem_limit = int(min(48 * 1024 * 1024, max(vmem_need + (4 << 20), 16 << 20)))

    partials = pl.pallas_call(
        kernel,
        out_shape=jax.ShapeDtypeStruct((n_splits, M, M), jnp.float32),
        grid_spec=pltpu.PrefetchScalarGridSpec(
            num_scalar_prefetch=0,
            grid=(n_splits, n_inner),
            in_specs=in_specs,
            out_specs=pl.BlockSpec((1, M, M), lambda s, k: (s, 0, 0)),
        ),
        compiler_params=pltpu.CompilerParams(
            dimension_semantics=("parallel", "arbitrary"),
            vmem_limit_bytes=vmem_limit,
        ),
    )(*args)
    return partials.sum(axis=0)


def style_loss_pallas(features_flat, target, style_weight, denom,
                      mask_flat=None, **tiling_kwargs):
    G = gram_matrix_pallas(features_flat, mask_flat, **tiling_kwargs) / float(denom)
    diff = G - target
    # tiny (M, M) epilogue; the heavy (M, K) streaming stays in the kernel
    return jnp.mean(diff * diff) * float(style_weight)


# ---------------------------------------------------------------------------
# Module port
# ---------------------------------------------------------------------------
class StyleLoss1:
    """JAX/Pallas port of StyleLoss_1: forward(x) returns x, stores .loss."""

    def __init__(self, target_feature, mask, i, style_weight,
                 tk_cap=2048, max_splits=2):
        b, c, h, w = target_feature.shape
        self.i = 0 if i == 0 else 1
        self.style_weight = float(style_weight)
        self.M, self.K = b * h, w * c
        self.denom = b * c * h * w
        self._tiling = dict(tk_cap=tk_cap, max_splits=max_splits)

        if self.i == 0:
            self.mask_flat = None
            self._mask_flat_f32 = None
        else:
            # mask = addcmul(ones, ones, mask, value=-1) == 1 - mask  (H, W)
            inv = 1.0 - mask.astype(jnp.float32)
            # cat C copies + unsqueeze -> (1, C, H, W); broadcast over batch;
            # raw row-major reshape matches torch .view(B*H, W*C) on NCHW.
            m_nchw = jnp.broadcast_to(inv[None, None, :, :], (b, c, h, w))
            m_flat_f32 = m_nchw.reshape(self.M, self.K)
            self._mask_flat_f32 = m_flat_f32
            # stream the mask at half the bytes when bf16 is exact (binary masks)
            m_bf16 = m_flat_f32.astype(jnp.bfloat16)
            if bool(jnp.all(m_bf16.astype(jnp.float32) == m_flat_f32)):
                self.mask_flat = m_bf16
            else:
                self.mask_flat = m_flat_f32

        # target gram: setup-time constant (detached), plain JAX glue
        tf = target_feature.astype(jnp.float32).reshape(self.M, self.K)
        if self.i == 1:
            tf = tf * self._mask_flat_f32
        self.target = (tf @ tf.T) / self.denom
        self.loss = None

    def __call__(self, x):
        f_flat = x.astype(jnp.float32).reshape(self.M, self.K)
        self.loss = style_loss_pallas(
            f_flat, self.target, self.style_weight, self.denom,
            mask_flat=self.mask_flat, **self._tiling)
        return x  # forward returns its input unchanged


def _ref_loss(xx, module):
    f = xx.astype(jnp.float32).reshape(module.M, module.K)
    if module.i == 1:
        f = f * module._mask_flat_f32
    G = (f @ f.T) / module.denom
    return jnp.mean((G - module.target) ** 2) * module.style_weight


if __name__ == "__main__":
    key = jax.random.PRNGKey(0)
    k1, k2, k3 = jax.random.split(key, 3)

    B, C, H, W = 2, 16, 16, 16           # small NCHW feature map
    target_feature = jax.random.normal(k1, (B, C, H, W), jnp.float32)
    x = jax.random.normal(k2, (B, C, H, W), jnp.float32)
    mask = (jax.random.uniform(k3, (H, W)) > 0.5).astype(jnp.float32)
    style_weight = 1000.0

    # unmasked branch (i = 0): specialized no-mask kernel, default tiling
    sl0 = StyleLoss1(target_feature, mask, i=0, style_weight=style_weight)
    out0 = sl0(x)
    loss0 = jax.block_until_ready(sl0.loss)
    assert out0.shape == x.shape
    r0 = _ref_loss(x, sl0)
    assert jnp.allclose(loss0, r0, rtol=1e-4, atol=1e-5), (loss0, r0)

    # masked branch (i = 1): exercise big-tile / two-way-split / multi-step
    # reduction code paths (all must match the pure-JAX reference)
    for cap, splits in [(2048, 2), (128, 2), (128, 1)]:
        sl1 = StyleLoss1(target_feature, mask, i=1, style_weight=style_weight,
                         tk_cap=cap, max_splits=splits)
        out1 = sl1(x)
        loss1 = jax.block_until_ready(sl1.loss)
        assert out1.shape == x.shape
        r1 = _ref_loss(x, sl1)
        assert jnp.allclose(loss1, r1, rtol=1e-4, atol=1e-5), (cap, splits, loss1, r1)

    print("KERNEL_OK")
</pallas_src>

<mosaic_0001>
module attributes {stable_mosaic.version = 11 : i64} {
  func.func @_gram_partial_kernel(%arg0: i32, %arg1: i32, %arg2: memref<32x256xf32, #tpu.memory_space<vmem>>, %arg3: memref<1x32x32xf32, #tpu.memory_space<vmem>>) attributes {dimension_semantics = [#tpu.dimension_semantics<parallel>, #tpu.dimension_semantics<arbitrary>], iteration_bounds = array<i64: 1, 1>, scalar_prefetch = 0 : i64, scratch_operands = 0 : i64, tpu.core_type = #tpu.core_type<tc>, window_params = [{transform_indices = @transform_0, window_bounds = array<i64: 32, 256>}, {transform_indices = @transform_1, window_bounds = array<i64: 1, 32, 32>}]} {
    %c0_i32 = arith.constant 0 : i32
    %0 = arith.cmpi eq, %arg1, %c0_i32 : i32
    %1 = arith.extui %0 : i1 to i32
    %c0_i32_0 = arith.constant 0 : i32
    %2 = arith.cmpi ne, %1, %c0_i32_0 : i32
    scf.if %2 {
      %cst_8 = arith.constant 0.000000e+00 : f32
      %9 = vector.broadcast %cst_8 : f32 to vector<1x32x32xf32>
      %c0_9 = arith.constant 0 : index
      %c0_10 = arith.constant 0 : index
      %c0_11 = arith.constant 0 : index
      %10 = vector.load %arg3[%c0_9, %c0_10, %c0_11] : memref<1x32x32xf32, #tpu.memory_space<vmem>>, vector<1x32x32xf32>
      tpu.vector_store %arg3[%c0_9, %c0_10, %c0_11], %9 {strides = array<i32>} : memref<1x32x32xf32, #tpu.memory_space<vmem>>, vector<1x32x32xf32>,
    } else {
    }
    %c0 = arith.constant 0 : index
    %c0_1 = arith.constant 0 : index
    %3 = vector.load %arg2[%c0, %c0_1] : memref<32x256xf32, #tpu.memory_space<vmem>>, vector<32x256xf32>
    %c0_2 = arith.constant 0 : index
    %c0_3 = arith.constant 0 : index
    %c0_4 = arith.constant 0 : index
    %4 = vector.load %arg3[%c0_2, %c0_3, %c0_4] : memref<1x32x32xf32, #tpu.memory_space<vmem>>, vector<1x32x32xf32>
    %cst = arith.constant dense<0.000000e+00> : vector<32x32xf32>
    %5 = tpu.matmul %3, %3, %cst {dimension_numbers = #tpu.dot_dimension_numbers<[1], [1], [0], [0], [0, 0, 1, 0], [], []>} : vector<32x256xf32>, vector<32x256xf32>, vector<32x32xf32> -> vector<32x32xf32>
    %6 = vector.shape_cast %5 : vector<32x32xf32> to vector<1x32x32xf32>
    %7 = arith.addf %4, %6 : vector<1x32x32xf32>
    %c0_5 = arith.constant 0 : index
    %c0_6 = arith.constant 0 : index
    %c0_7 = arith.constant 0 : index
    %8 = vector.load %arg3[%c0_5, %c0_6, %c0_7] : memref<1x32x32xf32, #tpu.memory_space<vmem>>, vector<1x32x32xf32>
    tpu.vector_store %arg3[%c0_5, %c0_6, %c0_7], %7 {strides = array<i32>} : memref<1x32x32xf32, #tpu.memory_space<vmem>>, vector<1x32x32xf32>,
    return
  }
  func.func @transform_0(%arg0: i32, %arg1: i32) -> (i32, i32) {
    %c1_i32 = arith.constant 1 : i32
    %0 = arith.muli %arg0, %c1_i32 : i32
    %1 = arith.addi %0, %arg1 : i32
    %c0_i32 = arith.constant 0 : i32
    %c0_i32_0 = arith.constant 0 : i32
    return %c0_i32, %1 : i32, i32
  }
  func.func @transform_1(%arg0: i32, %arg1: i32) -> (i32, i32, i32) {
    %c0_i32 = arith.constant 0 : i32
    %c0_i32_0 = arith.constant 0 : i32
    %c0_i32_1 = arith.constant 0 : i32
    return %arg0, %c0_i32, %c0_i32_0 : i32, i32, i32
  }
}

</mosaic_0001>

<llo_original>
// kernel: tpu_custom_call.1
$region0: #{tpu_custom_call.1}
  #allocation0 [shape = 'u32[]', space=smem, size = 0x4, offset = 0x4, fixed_abs, tag = 'smem constant byte address 0x4 - core index']
  #allocation1 [shape = 'u32[144,128]{1,0:T(1,128)}', space=vmem, size = 0x12000, scoped, tag = 'internal scratch']
  %s0 = inlined_call_operand.hbm [shape: f32[32,256], index: 0, kind: input, shape index: {}]
  %s1 = inlined_call_operand.hbm [shape: f32[1,32,32], index: 1, kind: output, shape index: {}]
  %s2 = sld [smem:[#allocation0]]
  $region22: #{tpu_custom_call.1} parent=0
    _
  %s4 = ssub.s32 1, %s2
  %s5 = scalar_select 0, %s4, %s2
  $region1: #{tpu_custom_call.1} parent=0
    #allocation2 [shape = 'u8[32768]{0}', space=vmem, size = 0x8000, scoped, tag = 'input window, operand 0, single buffered']
    #allocation3 [shape = 's32[1]{0}', space=sflag, size = 0x4, scoped, tag = 'scoped memory for tpu_custom_call.1']
    #allocation4 [shape = 's32[1]{0}', space=sflag, size = 0x4, scoped, tag = 'scoped memory for tpu_custom_call.1']
    #allocation5 [shape = 'u8[16384]{0}', space=vmem, size = 0x4000, scoped, tag = 'output window, operand 0, single buffered']
    %6 = vsyncpa [#allocation3], 0
    %7 = vsyncpa [#allocation4], 0
    // Predicated region
    $region2: #{tpu_custom_call.1} parent=1 // pred_check
      _
    $region3: #{tpu_custom_call.1} parent=1 // pred_check_branch
      %9 = sbr.rel (0) target = $region5
    $region4: #{tpu_custom_call.1} parent=1 // pred_region
      %s10 = sadd.s32 0, 0
      %s11 = smul.u32 2, %s10
      %s13 = ssub.s32 1024, 1024
      %14 = vsyncadd [#allocation3], %s13
      %s15 = smul.addr %s11, 128
      %s16 = scalar_lea.hbm %s0, %s15
      %s17 = sshll.u32 [#allocation2], 4
      %s18 = int_to_ptr.vmem [resolvable:$true] %s17
      %23 = dma.hbm_to_vmem [thread:$0]  %s16, 1024, %s18, [#allocation3], 256, 256, 16
    $region5: #{tpu_custom_call.1} parent=1 // pred_fallthru
      _
    // Predicated region
    $region6: #{tpu_custom_call.1} parent=1 // pred_check
      _
    $region7: #{tpu_custom_call.1} parent=1 // pred_check_branch
      %25 = sbr.rel (0) target = $region9
    $region8: #{tpu_custom_call.1} parent=1 // pred_region
      %26 = dma.done [#allocation3], 1024
    $region9: #{tpu_custom_call.1} parent=1 // pred_fallthru
      _
    %s27 = sadd.s32 0, 0
    %s28 = smul.u32 2, %s27
    %p29 = scmp.eq.s32.totalorder 0, 0
    // Predicated region
    $region10: #{tpu_custom_call.1} parent=1 // pred_check
      %p30 = pneg %p29
    $region11: #{tpu_custom_call.1} parent=1 // pred_check_branch
      %32 = sbr.rel (%p30) target = $region13
    $region12: #{tpu_custom_call.1} parent=1 // pred_region
      %vm33 = vcmask 261120
      %34 = vst.msk [vmem:[#allocation5] sm:$0xff] %vm33, 0.0
      %35 = vst.msk [vmem:[#allocation5 + $0x8] sm:$0xff] %vm33, 0.0
      %36 = vst.msk [vmem:[#allocation5 + $0x10] sm:$0xff] %vm33, 0.0
      %37 = vst.msk [vmem:[#allocation5 + $0x18] sm:$0xff] %vm33, 0.0
    $region13: #{tpu_custom_call.1} parent=1 // pred_fallthru
      _
    %v38 = vld [vmem:[#allocation2] sm:$0xff]
    %v39 = vld [vmem:[#allocation2 + $0x8] sm:$0xff]
    %v40 = vld [vmem:[#allocation2 + $0x10] sm:$0xff]
    %v41 = vld [vmem:[#allocation2 + $0x18] sm:$0xff]
    %v42 = vld [vmem:[#allocation2 + $0x20] sm:$0xff]
    %v43 = vld [vmem:[#allocation2 + $0x28] sm:$0xff]
    %v44 = vld [vmem:[#allocation2 + $0x30] sm:$0xff]
    %v45 = vld [vmem:[#allocation2 + $0x38] sm:$0xff]
    %v46 = vld [vmem:[#allocation5] sm:$0xff]
    %v47 = vld [vmem:[#allocation5 + $0x8] sm:$0xff]
    %v48 = vld [vmem:[#allocation5 + $0x10] sm:$0xff]
    %v49 = vld [vmem:[#allocation5 + $0x18] sm:$0xff]
    %50 = vmatprep.subr.mxu0 %v39
    %51 = vmatpush1.xpose.msra.mxu0 %v38
    %52 = vmatprep.subr.mxu0 %v41
    %53 = vmatpush1.xpose.msra.mxu0 %v40
    %54 = vmatprep.subr.mxu0 %v43
    %55 = vmatpush1.xpose.msra.mxu0 %v42
    %56 = vmatprep.subr.mxu0 %v45
    %57 = vmatpush1.xpose.msra.mxu0 %v44
    %58 = vmatprep.subr.mxu0 0.0
    %59 = vmatpush1.xpose.msra.mxu0 0.0
    %60 = vmatprep.subr.mxu0 0.0
    %61 = vmatpush1.xpose.msra.mxu0 0.0
    %62 = vmatprep.subr.mxu0 0.0
    %63 = vmatpush1.xpose.msra.mxu0 0.0
    %64 = vmatprep.subr.mxu0 0.0
    %65 = vmatpush1.xpose.msra.mxu0 0.0
    %66 = vmatprep.subr.mxu0 0.0
    %67 = vmatpush1.xpose.msra.mxu0 0.0
    %68 = vmatprep.subr.mxu0 0.0
    %69 = vmatpush1.xpose.msra.mxu0 0.0
    %70 = vmatprep.subr.mxu0 0.0
    %71 = vmatpush1.xpose.msra.mxu0 0.0
    %72 = vmatprep.subr.mxu0 0.0
    %73 = vmatpush1.xpose.msra.mxu0 0.0
    %74 = vmatprep.subr.mxu0 0.0
    %75 = vmatpush1.xpose.msra.mxu0 0.0
    %76 = vmatprep.subr.mxu0 0.0
    %77 = vmatpush1.xpose.msra.mxu0 0.0
    %78 = vmatprep.subr.mxu0 0.0
    %79 = vmatpush1.xpose.msra.mxu0 0.0
    %80 = vmatprep.subr.mxu0 0.0
    %81 = vmatpush1.xpose.msra.mxu0 0.0
    %82 = vmatprep.subr.mxu0 0.0
    %83 = vmatpush1.xpose.msra.mxu0 0.0
    %84 = vmatprep.subr.mxu0 0.0
    %85 = vmatpush1.xpose.msra.mxu0 0.0
    %86 = vmatprep.subr.mxu0 0.0
    %87 = vmatpush1.xpose.msra.mxu0 0.0
    %88 = vmatprep.subr.mxu0 0.0
    %89 = vmatpush1.xpose.msra.mxu0 0.0
    %90 = vmatprep.subr.mxu0 0.0
    %91 = vmatpush1.xpose.msra.mxu0 0.0
    %92 = vmatprep.subr.mxu0 0.0
    %93 = vmatpush1.xpose.msra.mxu0 0.0
    %94 = vmatprep.subr.mxu0 0.0
    %95 = vmatpush1.xpose.msra.mxu0 0.0
    %96 = vmatprep.subr.mxu0 0.0
    %97 = vmatpush1.xpose.msra.mxu0 0.0
    %98 = vmatprep.subr.mxu0 0.0
    %99 = vmatpush1.xpose.msra.mxu0 0.0
    %100 = vmatprep.subr.mxu0 0.0
    %101 = vmatpush1.xpose.msra.mxu0 0.0
    %102 = vmatprep.subr.mxu0 0.0
    %103 = vmatpush1.xpose.msra.mxu0 0.0
    %104 = vmatprep.subr.mxu0 0.0
    %105 = vmatpush1.xpose.msra.mxu0 0.0
    %106 = vmatprep.subr.mxu0 0.0
    %107 = vmatpush1.xpose.msra.mxu0 0.0
    %108 = vmatprep.subr.mxu0 0.0
    %109 = vmatpush1.xpose.msra.mxu0 0.0
    %110 = vmatprep.subr.mxu0 0.0
    %111 = vmatpush1.xpose.msra.mxu0 0.0
    %112 = vmatprep.subr.mxu0 0.0
    %113 = vmatpush1.xpose.msra.mxu0 0.0
    %114 = vmatprep.mubr.f32.mxu0 %v39
    %115 = vmatmul.mubr.f32.gmra.mrb[0].mxu0 %v38
    %v116 = vpop.f32.mrb[0].mxu0
    %v117 = vadd.f32 0.0, %v116
    %v118 = vpop.f32.mrb[0].mxu0
    %119 = vmatprep.mubr.f32.mxu0 %v41
    %120 = vmatmul.mubr.f32.gmra.mrb[0].mxu0 %v40
    %v121 = vpop.f32.mrb[0].mxu0
    %v122 = vadd.f32 0.0, %v121
    %v123 = vpop.f32.mrb[0].mxu0
    %124 = vmatprep.mubr.f32.mxu0 %v43
    %125 = vmatmul.mubr.f32.gmra.mrb[0].mxu0 %v42
    %v126 = vpop.f32.mrb[0].mxu0
    %v127 = vadd.f32 0.0, %v126
    %v128 = vpop.f32.mrb[0].mxu0
    %129 = vmatprep.mubr.f32.mxu0 %v45
    %130 = vmatmul.mubr.f32.gmra.mrb[0].mxu0 %v44
    %v131 = vpop.f32.mrb[0].mxu0
    %v132 = vadd.f32 0.0, %v131
    %v133 = vpop.f32.mrb[0].mxu0
    %134 = vdwg.mxu0
    %v135 = vadd.f32 %v46, %v117
    %v136 = vadd.f32 %v47, %v122
    %v137 = vadd.f32 %v48, %v127
    %v138 = vadd.f32 %v49, %v132
    %vm139 = vcmask 261120
    %140 = vst.msk [vmem:[#allocation5] sm:$0xff] %vm139, %v135
    %141 = vst.msk [vmem:[#allocation5 + $0x8] sm:$0xff] %vm139, %v136
    %142 = vst.msk [vmem:[#allocation5 + $0x10] sm:$0xff] %vm139, %v137
    %143 = vst.msk [vmem:[#allocation5 + $0x18] sm:$0xff] %vm139, %v138
    // Predicated region
    $region14: #{tpu_custom_call.1} parent=1 // pred_check
      _
    $region15: #{tpu_custom_call.1} parent=1 // pred_check_branch
      %145 = sbr.rel (0) target = $region17
    $region16: #{tpu_custom_call.1} parent=1 // pred_region
      %s147 = ssub.s32 512, 512
      %148 = vsyncadd [#allocation4], %s147
      %s149 = sshll.u32 [#allocation5], 4
      %s150 = int_to_ptr.vmem [resolvable:$true] %s149
      %155 = dma.vmem_to_hbm [thread:$0]  %s150, 512, %s1, [#allocation4], 128, 128, 8
    $region17: #{tpu_custom_call.1} parent=1 // pred_fallthru
      _
    // Predicated region
    $region18: #{tpu_custom_call.1} parent=1 // pred_check
      _
    $region19: #{tpu_custom_call.1} parent=1 // pred_check_branch
      %157 = sbr.rel (0) target = $region21
    $region20: #{tpu_custom_call.1} parent=1 // pred_region
      %158 = dma.done [#allocation4], 512
    $region21: #{tpu_custom_call.1} parent=1 // pred_fallthru
      _
    %159 = vsyncpa [#allocation3], 1
    %160 = vsyncpa [#allocation4], 1

</llo_original>
